<compile_context>
chip_gen: v7x
topology: tpu7x:2x2x1
jax: 0.10.0
libtpu: 0.0.40
codegen_flags: <defaults>
</compile_context>

<pallas_src>
import jax
import jax.numpy as jnp
from jax import lax
from jax.experimental import pallas as pl
from jax.experimental.pallas import tpu as pltpu


CHUNK = 128  # lane-width compute chunk inside each DMA tile (always divides tn_eff)


def ea_kernel(x_ref, waT_ref, ba_ref, wbT_ref, shift_ref, o_ref):
    # x_ref / o_ref: (1, C, tn) channels-first tiles; positions map to the lane axis.
    x_view = x_ref.at[0]                       # (C, tn) ref view, no load
    o_view = o_ref.at[0]

    waT = waT_ref[...]                         # (K, C)   resident, 4 vregs
    wbT = wbT_ref[...]                         # (C, K)   resident, 4 vregs
    k = waT.shape[0]
    # 8 identical rows keep the MXU lhs sublane-aligned; only row 0 of the result is used.
    ones8 = jnp.ones((8, k), dtype=waT.dtype)

    tn = x_ref.shape[2]
    n_chunks = tn // CHUNK                     # static; tn is a multiple of CHUNK

    def body(ci, carry):
        start = pl.multiple_of(ci * CHUNK, CHUNK)
        x = x_view[:, pl.ds(start, CHUNK)]                                   # (C, CHUNK) f32

        # Fused conv1 -> linear_0:  attn = (W0 @ W1) @ x + W0 @ b1
        attn = jnp.dot(waT, x.astype(waT.dtype),
                       preferred_element_type=jnp.float32)
        attn = attn + ba_ref[...]                                            # (K, CHUNK)

        # "softmax" in the module is Sigmoid, then L1-normalize over K (per position).
        attn = jax.nn.sigmoid(attn)

        # K-reduction on the MXU (under-filled and has slack), reciprocal on a
        # (1, CHUNK) row, then a cheap VPU multiply — no full-tensor divide.
        denom = jnp.dot(ones8, attn, preferred_element_type=jnp.float32)[0:1, :]
        inv = pl.reciprocal(1e-9 + denom, approx=False)                      # (1, CHUNK)
        attn = attn * inv

        # Fused linear_1 -> conv2 -> eval-mode BN:
        #   z = ((bn_scale * W2) @ Wl1) @ attn + bn_shift
        z = jnp.dot(wbT, attn.astype(wbT.dtype),
                    preferred_element_type=jnp.float32)
        z = z + shift_ref[...]                                               # (C, CHUNK)

        # Residual + ReLU, lane-dense store (start is a multiple of 128).
        o_view[:, pl.ds(start, CHUNK)] = jnp.maximum(z + x, 0.0).astype(o_ref.dtype)
        return carry

    lax.fori_loop(0, n_chunks, body, 0, unroll=min(n_chunks, 8))


def ea_forward(x_bcn, params, *, tn=2048, mxu_dtype=jnp.float32):
    """x_bcn: (B, C, N) float32, same layout as the PyTorch Conv1d input.

    mxu_dtype=jnp.bfloat16 halves MXU passes / operand VMEM (validate tolerance
    before enabling); default f32 matches the PyTorch float32 math bit-closely.
    """
    B, C, N = x_bcn.shape
    K = params["w0"].shape[0]

    # ---- trace-time algebraic fusion (all in f32) --------------------------
    eps = 1e-5
    inv_std = 1.0 / jnp.sqrt(params["bn_var"] + eps)
    scale = params["bn_gamma"] * inv_std                     # (C,)
    shift = params["bn_beta"] - params["bn_mean"] * scale    # (C,)

    waT = (params["w0"] @ params["w1"]).astype(mxu_dtype)           # (K, C)
    ba = params["w0"] @ params["b1"]                                # (K,)  kept f32
    wbT = ((scale[:, None] * params["w2"]) @ params["wl1"]).astype(mxu_dtype)  # (C, K)

    # Pre-broadcast bias / BN shift to the chunk lane width: full-width adds in the
    # kernel, no per-chunk lane broadcast through the XLU.
    ba_b = jnp.broadcast_to(ba[:, None].astype(jnp.float32), (K, CHUNK))
    shift_b = jnp.broadcast_to(shift[:, None].astype(jnp.float32), (C, CHUNK))

    # ---- position (lane) tiling --------------------------------------------
    lane = CHUNK
    n_lane_blocks = pl.cdiv(N, lane)                  # N in 128-lane units (ceil)
    tn_eff = min(tn, n_lane_blocks * lane)
    tn_eff = max(lane, (tn_eff // lane) * lane)       # multiple of 128
    # Ensure >= 2 grid steps along the position axis when N allows: feeds both
    # v7x TensorCores even at B == 1 and lets the pipeline hide the tile DMAs.
    if pl.cdiv(n_lane_blocks * lane, tn_eff) < 2 and n_lane_blocks >= 2:
        tn_eff = ((n_lane_blocks + 1) // 2) * lane
    n_steps = pl.cdiv(N, tn_eff)
    # No jnp.pad / trailing slice: a partial last tile is handled by Pallas
    # edge-block masking (per-position math, so padded columns are independent).

    const = lambda shape: pl.BlockSpec(shape, lambda b, j: (0, 0))  # resident weights

    out = pl.pallas_call(
        ea_kernel,
        out_shape=jax.ShapeDtypeStruct((B, C, N), x_bcn.dtype),
        grid_spec=pltpu.PrefetchScalarGridSpec(
            num_scalar_prefetch=0,
            grid=(B, n_steps),
            in_specs=[
                pl.BlockSpec((1, C, tn_eff), lambda b, j: (b, 0, j)),  # x tile
                const((K, C)),        # fused W0 @ W1
                const((K, CHUNK)),    # fused W0 @ b1 (pre-broadcast to lane width)
                const((C, K)),        # fused (bn_scale * W2) @ Wl1
                const((C, CHUNK)),    # BN shift (pre-broadcast to lane width)
            ],
            out_specs=pl.BlockSpec((1, C, tn_eff), lambda b, j: (b, 0, j)),
        ),
        compiler_params=pltpu.CompilerParams(
            dimension_semantics=("parallel", "parallel")),
    )(x_bcn, waT, ba_b, wbT, shift_b)

    return out


def make_params(key, c, k):
    """Deterministic synthetic parameters matching the PyTorch module shapes."""
    ks = jax.random.split(key, 6)
    s = 0.1
    return {
        "w1":  jax.random.normal(ks[0], (c, c), jnp.float32) * s,   # conv1.weight (c,c,1)
        "b1":  jax.random.normal(ks[1], (c,),   jnp.float32) * s,   # conv1.bias
        "w0":  jax.random.normal(ks[2], (k, c), jnp.float32) * s,   # linear_0.weight (k,c,1)
        "wl1": jax.random.normal(ks[3], (c, k), jnp.float32) * s,   # linear_1.weight (c,k,1)
        "w2":  jax.random.normal(ks[4], (c, c), jnp.float32) * s,   # conv2[0].weight (c,c,1)
        "bn_gamma": jnp.ones((c,), jnp.float32),
        "bn_beta":  jnp.zeros((c,), jnp.float32),
        "bn_mean":  jnp.zeros((c,), jnp.float32),
        "bn_var":   jnp.ones((c,), jnp.float32),
    }


def ea_reference(x_bcn, params):
    """Plain-JAX reference of the same forward (unfused, eval-mode BN)."""
    x = jnp.transpose(x_bcn, (0, 2, 1))                      # (B, N, C)
    idn = x
    h = x @ params["w1"].T + params["b1"]
    attn = h @ params["w0"].T                                # (B, N, K)
    attn = jax.nn.sigmoid(attn)
    attn = attn / (1e-9 + attn.sum(axis=-1, keepdims=True))  # sum over K (dim=1 in (B,K,N))
    y = attn @ params["wl1"].T
    z = y @ params["w2"].T
    eps = 1e-5
    inv_std = 1.0 / jnp.sqrt(params["bn_var"] + eps)
    z = (z - params["bn_mean"]) * params["bn_gamma"] * inv_std + params["bn_beta"]
    out = jnp.maximum(z + idn, 0.0)
    return jnp.transpose(out, (0, 2, 1))


if __name__ == "__main__":
    B, C, N, K = 2, 32, 512, 128   # EA(c=32, k=128), input (B, C, N)

    key = jax.random.PRNGKey(0)
    kx, kp = jax.random.split(key)
    x = jax.random.normal(kx, (B, C, N), jnp.float32)
    params = make_params(kp, C, K)

    out = ea_forward(x, params)
    out = jax.block_until_ready(out)

    ref = ea_reference(x, params)
    assert out.shape == (B, C, N)
    assert jnp.allclose(out, ref, atol=1e-4, rtol=1e-4), "mismatch vs reference"

    print("KERNEL_OK")
</pallas_src>

<mosaic_0001>
module attributes {stable_mosaic.version = 11 : i64} {
  func.func @ea_kernel(%arg0: i32, %arg1: i32, %arg2: memref<1x32x256xf32, #tpu.memory_space<vmem>>, %arg3: memref<128x32xf32, #tpu.memory_space<vmem>>, %arg4: memref<128x128xf32, #tpu.memory_space<vmem>>, %arg5: memref<32x128xf32, #tpu.memory_space<vmem>>, %arg6: memref<32x128xf32, #tpu.memory_space<vmem>>, %arg7: memref<1x32x256xf32, #tpu.memory_space<vmem>>) attributes {dimension_semantics = [#tpu.dimension_semantics<parallel>, #tpu.dimension_semantics<parallel>], iteration_bounds = array<i64: 2, 2>, scalar_prefetch = 0 : i64, scratch_operands = 0 : i64, tpu.core_type = #tpu.core_type<tc>, window_params = [{transform_indices = @transform_0, window_bounds = array<i64: 1, 32, 256>}, {pipeline_mode = #tpu.pipeline_mode<synchronous>, transform_indices = @transform_1, window_bounds = array<i64: 128, 32>}, {pipeline_mode = #tpu.pipeline_mode<synchronous>, transform_indices = @transform_2, window_bounds = array<i64: 128, 128>}, {pipeline_mode = #tpu.pipeline_mode<synchronous>, transform_indices = @transform_3, window_bounds = array<i64: 32, 128>}, {pipeline_mode = #tpu.pipeline_mode<synchronous>, transform_indices = @transform_4, window_bounds = array<i64: 32, 128>}, {transform_indices = @transform_5, window_bounds = array<i64: 1, 32, 256>}]} {
    %c0 = arith.constant 0 : index
    %c0_0 = arith.constant 0 : index
    %0 = vector.load %arg3[%c0, %c0_0] : memref<128x32xf32, #tpu.memory_space<vmem>>, vector<128x32xf32>
    %c0_1 = arith.constant 0 : index
    %c0_2 = arith.constant 0 : index
    %1 = vector.load %arg5[%c0_1, %c0_2] : memref<32x128xf32, #tpu.memory_space<vmem>>, vector<32x128xf32>
    %cst = arith.constant 1.000000e+00 : f32
    %2 = vector.broadcast %cst : f32 to vector<8x128xf32>
    %c0_i32 = arith.constant 0 : i32
    %c0_i32_3 = arith.constant 0 : i32
    %c0_i32_4 = arith.constant 0 : i32
    %c128_i32 = arith.constant 128 : i32
    %3 = arith.muli %c0_i32_4, %c128_i32 : i32
    %4 = tpu.assume_multiple %3, 128 : i32
    %c0_i32_5 = arith.constant 0 : i32
    %c0_i32_6 = arith.constant 0 : i32
    %5 = tpu.memref_slice %arg2[%c0_i32, %c0_i32_5, %c0_i32_6] : memref<1x32x256xf32, #tpu.memory_space<vmem>> -> memref<1x32x256xf32, #tpu.memory_space<vmem>>
    %6 = tpu.memref_squeeze %5 : memref<1x32x256xf32, #tpu.memory_space<vmem>> -> memref<32x256xf32, #tpu.memory_space<vmem>>
    %c0_7 = arith.constant 0 : index
    %7 = arith.index_cast %4 : i32 to index
    %8 = vector.load %6[%c0_7, %7] : memref<32x256xf32, #tpu.memory_space<vmem>>, vector<32x128xf32>
    %cst_8 = arith.constant dense<0.000000e+00> : vector<128x128xf32>
    %9 = tpu.matmul %0, %8, %cst_8 {dimension_numbers = #tpu.dot_dimension_numbers<[1], [0], [0], [1], [0, 0, 1, 1], [], []>} : vector<128x32xf32>, vector<32x128xf32>, vector<128x128xf32> -> vector<128x128xf32>
    %c0_9 = arith.constant 0 : index
    %c0_10 = arith.constant 0 : index
    %10 = vector.load %arg4[%c0_9, %c0_10] : memref<128x128xf32, #tpu.memory_space<vmem>>, vector<128x128xf32>
    %11 = arith.addf %9, %10 : vector<128x128xf32>
    %12 = arith.negf %11 : vector<128x128xf32>
    %13 = math.exp %12 : vector<128x128xf32>
    %cst_11 = arith.constant 1.000000e+00 : f32
    %14 = vector.broadcast %cst_11 : f32 to vector<128x128xf32>
    %15 = arith.addf %14, %13 : vector<128x128xf32>
    %16 = arith.divf %14, %15 : vector<128x128xf32>
    %cst_12 = arith.constant dense<0.000000e+00> : vector<8x128xf32>
    %17 = tpu.matmul %2, %16, %cst_12 {dimension_numbers = #tpu.dot_dimension_numbers<[1], [0], [0], [1], [0, 0, 1, 1], [], []>} : vector<8x128xf32>, vector<128x128xf32>, vector<8x128xf32> -> vector<8x128xf32>
    %18 = vector.extract_strided_slice %17 {offsets = [0, 0], sizes = [1, 128], strides = [1, 1]} : vector<8x128xf32> to vector<1x128xf32>
    %cst_13 = arith.constant 9.99999971E-10 : f32
    %19 = vector.broadcast %cst_13 : f32 to vector<1x128xf32>
    %20 = arith.addf %19, %18 : vector<1x128xf32>
    %21 = tpu.reciprocal %20 : vector<1x128xf32> -> vector<1x128xf32>
    %22 = vector.broadcast %21 : vector<1x128xf32> to vector<128x128xf32>
    %23 = arith.mulf %16, %22 : vector<128x128xf32>
    %cst_14 = arith.constant dense<0.000000e+00> : vector<32x128xf32>
    %24 = tpu.matmul %1, %23, %cst_14 {dimension_numbers = #tpu.dot_dimension_numbers<[1], [0], [0], [1], [0, 0, 1, 1], [], []>} : vector<32x128xf32>, vector<128x128xf32>, vector<32x128xf32> -> vector<32x128xf32>
    %c0_15 = arith.constant 0 : index
    %c0_16 = arith.constant 0 : index
    %25 = vector.load %arg6[%c0_15, %c0_16] : memref<32x128xf32, #tpu.memory_space<vmem>>, vector<32x128xf32>
    %26 = arith.addf %24, %25 : vector<32x128xf32>
    %27 = arith.addf %26, %8 : vector<32x128xf32>
    %cst_17 = arith.constant 0.000000e+00 : f32
    %28 = vector.broadcast %cst_17 : f32 to vector<32x128xf32>
    %29 = arith.maximumf %27, %28 : vector<32x128xf32>
    %c0_i32_18 = arith.constant 0 : i32
    %c0_i32_19 = arith.constant 0 : i32
    %30 = tpu.memref_slice %arg7[%c0_i32_3, %c0_i32_18, %c0_i32_19] : memref<1x32x256xf32, #tpu.memory_space<vmem>> -> memref<1x32x256xf32, #tpu.memory_space<vmem>>
    %31 = tpu.memref_squeeze %30 : memref<1x32x256xf32, #tpu.memory_space<vmem>> -> memref<32x256xf32, #tpu.memory_space<vmem>>
    %c0_20 = arith.constant 0 : index
    %32 = arith.index_cast %4 : i32 to index
    %33 = vector.load %31[%c0_20, %32] : memref<32x256xf32, #tpu.memory_space<vmem>>, vector<32x128xf32>
    tpu.vector_store %31[%c0_20, %32], %29 {strides = array<i32>} : memref<32x256xf32, #tpu.memory_space<vmem>>, vector<32x128xf32>,
    %c1_i32 = arith.constant 1 : i32
    %c128_i32_21 = arith.constant 128 : i32
    %34 = arith.muli %c1_i32, %c128_i32_21 : i32
    %35 = tpu.assume_multiple %34, 128 : i32
    %c0_i32_22 = arith.constant 0 : i32
    %c0_i32_23 = arith.constant 0 : i32
    %36 = tpu.memref_slice %arg2[%c0_i32, %c0_i32_22, %c0_i32_23] : memref<1x32x256xf32, #tpu.memory_space<vmem>> -> memref<1x32x256xf32, #tpu.memory_space<vmem>>
    %37 = tpu.memref_squeeze %36 : memref<1x32x256xf32, #tpu.memory_space<vmem>> -> memref<32x256xf32, #tpu.memory_space<vmem>>
    %c0_24 = arith.constant 0 : index
    %38 = arith.index_cast %35 : i32 to index
    %39 = vector.load %37[%c0_24, %38] : memref<32x256xf32, #tpu.memory_space<vmem>>, vector<32x128xf32>
    %cst_25 = arith.constant dense<0.000000e+00> : vector<128x128xf32>
    %40 = tpu.matmul %0, %39, %cst_25 {dimension_numbers = #tpu.dot_dimension_numbers<[1], [0], [0], [1], [0, 0, 1, 1], [], []>} : vector<128x32xf32>, vector<32x128xf32>, vector<128x128xf32> -> vector<128x128xf32>
    %c0_26 = arith.constant 0 : index
    %c0_27 = arith.constant 0 : index
    %41 = vector.load %arg4[%c0_26, %c0_27] : memref<128x128xf32, #tpu.memory_space<vmem>>, vector<128x128xf32>
    %42 = arith.addf %40, %41 : vector<128x128xf32>
    %43 = arith.negf %42 : vector<128x128xf32>
    %44 = math.exp %43 : vector<128x128xf32>
    %cst_28 = arith.constant 1.000000e+00 : f32
    %45 = vector.broadcast %cst_28 : f32 to vector<128x128xf32>
    %46 = arith.addf %45, %44 : vector<128x128xf32>
    %47 = arith.divf %45, %46 : vector<128x128xf32>
    %cst_29 = arith.constant dense<0.000000e+00> : vector<8x128xf32>
    %48 = tpu.matmul %2, %47, %cst_29 {dimension_numbers = #tpu.dot_dimension_numbers<[1], [0], [0], [1], [0, 0, 1, 1], [], []>} : vector<8x128xf32>, vector<128x128xf32>, vector<8x128xf32> -> vector<8x128xf32>
    %49 = vector.extract_strided_slice %48 {offsets = [0, 0], sizes = [1, 128], strides = [1, 1]} : vector<8x128xf32> to vector<1x128xf32>
    %cst_30 = arith.constant 9.99999971E-10 : f32
    %50 = vector.broadcast %cst_30 : f32 to vector<1x128xf32>
    %51 = arith.addf %50, %49 : vector<1x128xf32>
    %52 = tpu.reciprocal %51 : vector<1x128xf32> -> vector<1x128xf32>
    %53 = vector.broadcast %52 : vector<1x128xf32> to vector<128x128xf32>
    %54 = arith.mulf %47, %53 : vector<128x128xf32>
    %cst_31 = arith.constant dense<0.000000e+00> : vector<32x128xf32>
    %55 = tpu.matmul %1, %54, %cst_31 {dimension_numbers = #tpu.dot_dimension_numbers<[1], [0], [0], [1], [0, 0, 1, 1], [], []>} : vector<32x128xf32>, vector<128x128xf32>, vector<32x128xf32> -> vector<32x128xf32>
    %c0_32 = arith.constant 0 : index
    %c0_33 = arith.constant 0 : index
    %56 = vector.load %arg6[%c0_32, %c0_33] : memref<32x128xf32, #tpu.memory_space<vmem>>, vector<32x128xf32>
    %57 = arith.addf %55, %56 : vector<32x128xf32>
    %58 = arith.addf %57, %39 : vector<32x128xf32>
    %cst_34 = arith.constant 0.000000e+00 : f32
    %59 = vector.broadcast %cst_34 : f32 to vector<32x128xf32>
    %60 = arith.maximumf %58, %59 : vector<32x128xf32>
    %c0_i32_35 = arith.constant 0 : i32
    %c0_i32_36 = arith.constant 0 : i32
    %61 = tpu.memref_slice %arg7[%c0_i32_3, %c0_i32_35, %c0_i32_36] : memref<1x32x256xf32, #tpu.memory_space<vmem>> -> memref<1x32x256xf32, #tpu.memory_space<vmem>>
    %62 = tpu.memref_squeeze %61 : memref<1x32x256xf32, #tpu.memory_space<vmem>> -> memref<32x256xf32, #tpu.memory_space<vmem>>
    %c0_37 = arith.constant 0 : index
    %63 = arith.index_cast %35 : i32 to index
    %64 = vector.load %62[%c0_37, %63] : memref<32x256xf32, #tpu.memory_space<vmem>>, vector<32x128xf32>
    tpu.vector_store %62[%c0_37, %63], %60 {strides = array<i32>} : memref<32x256xf32, #tpu.memory_space<vmem>>, vector<32x128xf32>,
    %c2_i32 = arith.constant 2 : i32
    return
  }
  func.func @transform_0(%arg0: i32, %arg1: i32) -> (i32, i32, i32) {
    %c0_i32 = arith.constant 0 : i32
    %c0_i32_0 = arith.constant 0 : i32
    return %arg0, %c0_i32, %arg1 : i32, i32, i32
  }
  func.func @transform_1(%arg0: i32, %arg1: i32) -> (i32, i32) {
    %c0_i32 = arith.constant 0 : i32
    %c0_i32_0 = arith.constant 0 : i32
    %c0_i32_1 = arith.constant 0 : i32
    return %c0_i32, %c0_i32_0 : i32, i32
  }
  func.func @transform_2(%arg0: i32, %arg1: i32) -> (i32, i32) {
    %c0_i32 = arith.constant 0 : i32
    %c0_i32_0 = arith.constant 0 : i32
    %c0_i32_1 = arith.constant 0 : i32
    return %c0_i32, %c0_i32_0 : i32, i32
  }
  func.func @transform_3(%arg0: i32, %arg1: i32) -> (i32, i32) {
    %c0_i32 = arith.constant 0 : i32
    %c0_i32_0 = arith.constant 0 : i32
    %c0_i32_1 = arith.constant 0 : i32
    return %c0_i32, %c0_i32_0 : i32, i32
  }
  func.func @transform_4(%arg0: i32, %arg1: i32) -> (i32, i32) {
    %c0_i32 = arith.constant 0 : i32
    %c0_i32_0 = arith.constant 0 : i32
    %c0_i32_1 = arith.constant 0 : i32
    return %c0_i32, %c0_i32_0 : i32, i32
  }
  func.func @transform_5(%arg0: i32, %arg1: i32) -> (i32, i32, i32) {
    %c0_i32 = arith.constant 0 : i32
    %c0_i32_0 = arith.constant 0 : i32
    return %arg0, %c0_i32, %arg1 : i32, i32, i32
  }
}

</mosaic_0001>

<llo_original>
// kernel: tpu_custom_call.1
$region0: #{tpu_custom_call.1}
  #allocation0 [shape = 'u32[]', space=smem, size = 0x4, offset = 0x4, fixed_abs, tag = 'smem constant byte address 0x4 - core index']
  #allocation1 [shape = 'u32[144,128]{1,0:T(1,128)}', space=vmem, size = 0x12000, scoped, tag = 'internal scratch']
  %s0 = inlined_call_operand.hbm [shape: f32[2,32,512], index: 0, kind: input, shape index: {}]
  %s1 = inlined_call_operand.vmem [shape: f32[128,32], index: 1, kind: input, shape index: {}]
  %s2 = inlined_call_operand.vmem [shape: f32[128,128], index: 2, kind: input, shape index: {}]
  %s3 = inlined_call_operand.vmem [shape: f32[32,128], index: 3, kind: input, shape index: {}]
  %s4 = inlined_call_operand.hbm [shape: f32[32,128], index: 4, kind: input, shape index: {}]
  %s5 = inlined_call_operand.hbm [shape: f32[2,32,512], index: 5, kind: output, shape index: {}]
  %s6 = sld [smem:[#allocation0]]
  $region61: #{tpu_custom_call.1} parent=0
    _
  %s8 = ssub.s32 1, %s6
  %s9 = scalar_select 0, %s8, %s6
  $region1: #{tpu_custom_call.1} parent=0
    #allocation2 [shape = 'u8[65536]{0}', space=vmem, size = 0x10000, scoped, tag = 'input window, operand 0']
    #allocation3 [shape = 's32[2]{0}', space=sflag, size = 0x8, scoped, tag = 'scoped memory for tpu_custom_call.1']
    #allocation4 [shape = 's32[2]{0}', space=sflag, size = 0x8, scoped, tag = 'scoped memory for tpu_custom_call.1']
    #allocation5 [shape = 'u8[16384]{0}', space=vmem, size = 0x4000, scoped, tag = 'input window, operand 4, single buffered']
    #allocation6 [shape = 's32[1]{0}', space=sflag, size = 0x4, scoped, tag = 'scoped memory for tpu_custom_call.1']
    #allocation7 [shape = 'u8[65536]{0}', space=vmem, size = 0x10000, scoped, tag = 'output window, operand 0']
    %10 = vsyncpa [#allocation3], 0
    %s11 = scalar_lea.sflag [#allocation3], 1
    %12 = vsyncpa %s11, 0
    %13 = vsyncpa [#allocation6], 0
    %14 = vsyncpa [#allocation4], 0
    %s15 = scalar_lea.sflag [#allocation4], 1
    %16 = vsyncpa %s15, 0
    loop: start=0, step=1, limit=6
    $region2: #{tpu_custom_call.1} parent=1 // loop_pre_header
      _
    $region3: #{tpu_custom_call.1} parent=1 // loop_header
      %s18 = sphi 0, %s22
      %p19 = scmp.ge.s32.totalorder %s18, 6
      %s25 = sphi 0, %s37
      %s26 = sphi 0, %s33
      %s27 = sphi 0, %s25
      %s28 = sphi 0, %s26
      %s29 = sphi 0, %s27
      %s30 = sphi 0, %s28
      %s42 = sphi 0, %s44
      %s45 = sphi 0, %s42
      %s46 = sphi 0, %s45
      %s62 = sphi 0, %s46
      %s66 = sphi 0, %s66
      %s68 = sphi 0, %s66
      %s69 = sphi 0, %s68
      %s83 = sphi 0, %s69
      %s87 = sphi 0, %s87
      %s89 = sphi 0, %s87
      %s90 = sphi 0, %s89
      %s104 = sphi 0, %s90
      %s108 = sphi 0, %s108
      %s110 = sphi 0, %s108
      %s111 = sphi 0, %s110
      %s125 = sphi 0, %s111
      %s129 = sphi 0, %s129
      %s131 = sphi 0, %s129
      %s132 = sphi 0, %s131
      %s146 = sphi 0, %s132
      %s154 = sphi 0, %s156
      %s157 = sphi 0, %s154
      %s158 = sphi 0, %s157
      %s174 = sphi 0, %s158
    $region4: #{tpu_custom_call.1} parent=1 // loop_header_branch
      %21 = sbr.rel (%p19) target = $region8
    $region5: #{tpu_custom_call.1} parent=1 // loop_body
      %s23 = ssub.s32 %s18, 1
      %s24 = ssub.s32 %s18, 2
      %s31 = sadd.s32 1, %s26
      %p32 = scmp.ge.s32.totalorder %s31, 2
      %s33 = scalar_select %p32, 0, %s31
      %s34 = sadd.s32 1, %s25
      %s35 = scalar_select %p32, %s34, %s25
      %p36 = scmp.ge.s32.totalorder %s35, 2
      %s37 = scalar_select %p36, 0, %s35
      %s38 = ssub.s32 %s25, %s37
      %s39 = ssub.s32 %s26, %s33
      %s40 = sor.u32 %s38, %s39
      %p41 = scmp.eq.s32.totalorder %s40, 0
      %s43 = sadd.s32 %s42, 1
      %s44 = scalar_select %p41, %s42, %s43
      %p47 = pneg %p41
      %p48 = scmp.eq.s32.totalorder %s18, 3
      %p49 = por %p47, %p48
      %p50 = scmp.ne.s32.totalorder %s42, %s45
      %p51 = scmp.eq.s32.totalorder %s18, 0
      %p52 = por %p50, %p51
      %p53 = scmp.ne.s32.totalorder %s42, %s45
      %p54 = scmp.eq.s32.totalorder %s23, 3
      %p55 = por %p53, %p54
      %p56 = scmp.ne.s32.totalorder %s45, %s46
      %p57 = scmp.eq.s32.totalorder %s23, 0
      %p58 = por %p56, %p57
      %p59 = scmp.ne.s32.totalorder %s45, %s46
      %p60 = scmp.eq.s32.totalorder %s24, 3
      %p61 = por %p59, %p60
      %p63 = scmp.ne.s32.totalorder %s46, %s62
      %p64 = scmp.eq.s32.totalorder %s24, 0
      %p65 = por %p63, %p64
      %s67 = sadd.s32 %s66, 1
      %p70 = scmp.eq.s32.totalorder %s18, 3
      %p71 = scmp.ne.s32.totalorder %s66, %s68
      %p72 = scmp.eq.s32.totalorder %s18, 0
      %p73 = por %p71, %p72
      %p74 = scmp.ne.s32.totalorder %s66, %s68
      %p75 = scmp.eq.s32.totalorder %s23, 3
      %p76 = por %p74, %p75
      %p77 = scmp.ne.s32.totalorder %s68, %s69
      %p78 = scmp.eq.s32.totalorder %s23, 0
      %p79 = por %p77, %p78
      %p80 = scmp.ne.s32.totalorder %s68, %s69
      %p81 = scmp.eq.s32.totalorder %s24, 3
      %p82 = por %p80, %p81
      %p84 = scmp.ne.s32.totalorder %s69, %s83
      %p85 = scmp.eq.s32.totalorder %s24, 0
      %p86 = por %p84, %p85
      %s88 = sadd.s32 %s87, 1
      %p91 = scmp.eq.s32.totalorder %s18, 3
      %p92 = scmp.ne.s32.totalorder %s87, %s89
      %p93 = scmp.eq.s32.totalorder %s18, 0
      %p94 = por %p92, %p93
      %p95 = scmp.ne.s32.totalorder %s87, %s89
      %p96 = scmp.eq.s32.totalorder %s23, 3
      %p97 = por %p95, %p96
      %p98 = scmp.ne.s32.totalorder %s89, %s90
      %p99 = scmp.eq.s32.totalorder %s23, 0
      %p100 = por %p98, %p99
      %p101 = scmp.ne.s32.totalorder %s89, %s90
      %p102 = scmp.eq.s32.totalorder %s24, 3
      %p103 = por %p101, %p102
      %p105 = scmp.ne.s32.totalorder %s90, %s104
      %p106 = scmp.eq.s32.totalorder %s24, 0
      %p107 = por %p105, %p106
      %s109 = sadd.s32 %s108, 1
      %p112 = scmp.eq.s32.totalorder %s18, 3
      %p113 = scmp.ne.s32.totalorder %s108, %s110
      %p114 = scmp.eq.s32.totalorder %s18, 0
      %p115 = por %p113, %p114
      %p116 = scmp.ne.s32.totalorder %s108, %s110
      %p117 = scmp.eq.s32.totalorder %s23, 3
      %p118 = por %p116, %p117
      %p119 = scmp.ne.s32.totalorder %s110, %s111
      %p120 = scmp.eq.s32.totalorder %s23, 0
      %p121 = por %p119, %p120
      %p122 = scmp.ne.s32.totalorder %s110, %s111
      %p123 = scmp.eq.s32.totalorder %s24, 3
      %p124 = por %p122, %p123
      %p126 = scmp.ne.s32.totalorder %s111, %s125
      %p127 = scmp.eq.s32.totalorder %s24, 0
      %p128 = por %p126, %p127
      %s130 = sadd.s32 %s129, 1
      %p133 = scmp.eq.s32.totalorder %s18, 3
      %p134 = scmp.ne.s32.totalorder %s129, %s131
      %p135 = scmp.eq.s32.totalorder %s18, 0
      %p136 = por %p134, %p135
      %p137 = scmp.ne.s32.totalorder %s129, %s131
      %p138 = scmp.eq.s32.totalorder %s23, 3
      %p139 = por %p137, %p138
      %p140 = scmp.ne.s32.totalorder %s131, %s132
      %p141 = scmp.eq.s32.totalorder %s23, 0
      %p142 = por %p140, %p141
      %p143 = scmp.ne.s32.totalorder %s131, %s132
      %p144 = scmp.eq.s32.totalorder %s24, 3
      %p145 = por %p143, %p144
      %p147 = scmp.ne.s32.totalorder %s132, %s146
      %p148 = scmp.eq.s32.totalorder %s24, 0
      %p149 = por %p147, %p148
      %s150 = ssub.s32 %s25, %s37
      %s151 = ssub.s32 %s26, %s33
      %s152 = sor.u32 %s150, %s151
      %p153 = scmp.eq.s32.totalorder %s152, 0
      %s155 = sadd.s32 %s154, 1
      %s156 = scalar_select %p153, %s154, %s155
      %p159 = pneg %p153
      %p160 = scmp.eq.s32.totalorder %s18, 3
      %p161 = por %p159, %p160
      %p162 = scmp.ne.s32.totalorder %s154, %s157
      %p163 = scmp.eq.s32.totalorder %s18, 0
      %p164 = por %p162, %p163
      %p165 = scmp.ne.s32.totalorder %s154, %s157
      %p166 = scmp.eq.s32.totalorder %s23, 3
      %p167 = por %p165, %p166
      %p168 = scmp.ne.s32.totalorder %s157, %s158
      %p169 = scmp.eq.s32.totalorder %s23, 0
      %p170 = por %p168, %p169
      %p171 = scmp.ne.s32.totalorder %s157, %s158
      %p172 = scmp.eq.s32.totalorder %s24, 3
      %p173 = por %p171, %p172
      %p175 = scmp.ne.s32.totalorder %s158, %s174
      %p176 = scmp.eq.s32.totalorder %s24, 0
      %p177 = por %p175, %p176
      %p178 = scmp.le.s32.totalorder 1, %s18
      %p179 = scmp.lt.s32.totalorder %s18, 5
      %p180 = pnand %p178, %p179
      %p181 = pneg %p180
      // Predicated region
      $region9: #{tpu_custom_call.1} parent=5 // pred_check
        _
      $region10: #{tpu_custom_call.1} parent=5 // pred_check_branch
        %183 = sbr.rel (%p180) target = $region12
      $region11: #{tpu_custom_call.1} parent=5 // pred_region
        %s184 = ssub.s32 %s18, 1
        // Predicated region
        $region13: #{tpu_custom_call.1} parent=11 // pred_check
          %p185 = pneg %p79
        $region14: #{tpu_custom_call.1} parent=11 // pred_check_branch
          %187 = sbr.rel (%p185) target = $region16
        $region15: #{tpu_custom_call.1} parent=11 // pred_region
          _
        $region16: #{tpu_custom_call.1} parent=11 // pred_fallthru
          _
        // Predicated region
        $region17: #{tpu_custom_call.1} parent=11 // pred_check
          %p188 = pneg %p100
        $region18: #{tpu_custom_call.1} parent=11 // pred_check_branch
          %190 = sbr.rel (%p188) target = $region20
        $region19: #{tpu_custom_call.1} parent=11 // pred_region
          _
        $region20: #{tpu_custom_call.1} parent=11 // pred_fallthru
          _
        // Predicated region
        $region21: #{tpu_custom_call.1} parent=11 // pred_check
          %p191 = pneg %p121
        $region22: #{tpu_custom_call.1} parent=11 // pred_check_branch
          %193 = sbr.rel (%p191) target = $region24
        $region23: #{tpu_custom_call.1} parent=11 // pred_region
          _
        $region24: #{tpu_custom_call.1} parent=11 // pred_fallthru
          _
        // Predicated region
        $region25: #{tpu_custom_call.1} parent=11 // pred_check
          %p194 = pneg %p142
        $region26: #{tpu_custom_call.1} parent=11 // pred_check_branch
          %196 = sbr.rel (%p194) target = $region28
        $region27: #{tpu_custom_call.1} parent=11 // pred_region
          %s198 = ssub.s32 512, 512
          %199 = vsyncadd [#allocation6], %s198
          %s200 = sshll.u32 [#allocation5], 4
          %s201 = int_to_ptr.vmem [resolvable:$true] %s200
          %206 = dma.hbm_to_vmem [thread:$0]  %s4, 512, %s201, [#allocation6], 128, 128, 8
        $region28: #{tpu_custom_call.1} parent=11 // pred_fallthru
          _
      $region12: #{tpu_custom_call.1} parent=5 // pred_fallthru
        _
      %p207 = scmp.lt.s32.totalorder %s18, 4
      // Predicated region
      $region29: #{tpu_custom_call.1} parent=5 // pred_check
        %p208 = pneg %p207
      $region30: #{tpu_custom_call.1} parent=5 // pred_check_branch
        %210 = sbr.rel (%p208) target = $region32
      $region31: #{tpu_custom_call.1} parent=5 // pred_region
        // Predicated region
        $region33: #{tpu_custom_call.1} parent=31 // pred_check
          %p211 = pneg %p52
        $region34: #{tpu_custom_call.1} parent=31 // pred_check_branch
          %213 = sbr.rel (%p211) target = $region36
        $region35: #{tpu_custom_call.1} parent=31 // pred_region
          %s214 = sand.u32 %s42, 1
          %s215 = scalar_lea.sflag [#allocation3], %s214
          %s216 = sand.u32 %s42, 1
          %s217 = smul.addr %s216, 64
          %s218 = scalar_lea.vmem [#allocation2], %s217
          %s219 = smul.u32 2, %s26
          %s221 = ssub.s32 1024, 1024
          %222 = vsyncadd %s215, %s221
          %s223 = smul.addr %s25, 16
          %s224 = sadd.s32 %s219, %s223
          %s225 = smul.addr %s224, 128
          %s226 = scalar_lea.hbm %s0, %s225
          %s227 = sshll.u32 %s218, 4
          %s228 = int_to_ptr.vmem [resolvable:$true] %s227
          %233 = dma.hbm_to_vmem [thread:$0]  %s226, 1024, %s228, %s215, 512, 256, 16
        $region36: #{tpu_custom_call.1} parent=31 // pred_fallthru
          _
      $region32: #{tpu_custom_call.1} parent=5 // pred_fallthru
        _
      %p234 = scmp.le.s32.totalorder 1, %s18
      %p235 = scmp.lt.s32.totalorder %s18, 5
      %p236 = pnand %p234, %p235
      %p237 = pneg %p236
      // Predicated region
      $region37: #{tpu_custom_call.1} parent=5 // pred_check
        _
      $region38: #{tpu_custom_call.1} parent=5 // pred_check_branch
        %239 = sbr.rel (%p236) target = $region40
      $region39: #{tpu_custom_call.1} parent=5 // pred_region
        %s240 = ssub.s32 %s18, 1
        %s241 = sand.u32 %s45, 1
        %s242 = scalar_lea.sflag [#allocation3], %s241
        %s243 = sand.u32 %s45, 1
        %s244 = smul.addr %s243, 64
        %s245 = scalar_lea.vmem [#allocation2], %s244
        // Predicated region
        $region41: #{tpu_custom_call.1} parent=39 // pred_check
          %p246 = pneg %p58
        $region42: #{tpu_custom_call.1} parent=39 // pred_check_branch
          %248 = sbr.rel (%p246) target = $region44
        $region43: #{tpu_custom_call.1} parent=39 // pred_region
          %249 = dma.done %s242, 1024
        $region44: #{tpu_custom_call.1} parent=39 // pred_fallthru
          _
        // Predicated region
        $region45: #{tpu_custom_call.1} parent=39 // pred_check
          %p250 = pneg %p142
        $region46: #{tpu_custom_call.1} parent=39 // pred_check_branch
          %252 = sbr.rel (%p250) target = $region48
        $region47: #{tpu_custom_call.1} parent=39 // pred_region
          %253 = dma.done [#allocation6], 512
        $region48: #{tpu_custom_call.1} parent=39 // pred_fallthru
          _
        %s254 = sand.u32 %s45, 1
        %s255 = scalar_lea.sflag [#allocation3], %s254
        %s256 = sand.u32 %s45, 1
        %s257 = smul.addr %s256, 64
        %s258 = scalar_lea.vmem [#allocation2], %s257
        %p259 = pneg %p58
        %p260 = pneg %p55
        %p261 = pneg %p79
        %p262 = pneg %p76
        %p263 = pneg %p100
        %p264 = pneg %p97
        %p265 = pneg %p121
        %p266 = pneg %p118
        %p267 = pneg %p142
        %p268 = pneg %p139
        %p269 = pneg %p170
        %p270 = pneg %p167
        %s271 = sand.u32 %s157, 1
        %s272 = scalar_lea.sflag [#allocation4], %s271
        %s273 = sand.u32 %s157, 1
        %s274 = smul.addr %s273, 64
        %s275 = scalar_lea.vmem [#allocation7], %s274
        %s276 = smul.u32 2, %s28
        %s277 = smul.u32 2, %s28
        %v278 = vld [vmem:[%s1] sm:$0xff]
        %v279 = vld [vmem:[%s1 + $0x8] sm:$0xff]
        %v280 = vld [vmem:[%s1 + $0x10] sm:$0xff]
        %v281 = vld [vmem:[%s1 + $0x18] sm:$0xff]
        %v282 = vld [vmem:[%s1 + $0x20] sm:$0xff]
        %v283 = vld [vmem:[%s1 + $0x28] sm:$0xff]
        %v284 = vld [vmem:[%s1 + $0x30] sm:$0xff]
        %v285 = vld [vmem:[%s1 + $0x38] sm:$0xff]
        %v286 = vld [vmem:[%s1 + $0x40] sm:$0xff]
        %v287 = vld [vmem:[%s1 + $0x48] sm:$0xff]
        %v288 = vld [vmem:[%s1 + $0x50] sm:$0xff]
        %v289 = vld [vmem:[%s1 + $0x58] sm:$0xff]
        %v290 = vld [vmem:[%s1 + $0x60] sm:$0xff]
        %v291 = vld [vmem:[%s1 + $0x68] sm:$0xff]
        %v292 = vld [vmem:[%s1 + $0x70] sm:$0xff]
        %v293 = vld [vmem:[%s1 + $0x78] sm:$0xff]
        %v294 = vld [vmem:[%s3] sm:$0xff]
        %v295 = vld [vmem:[%s3 + $0x8] sm:$0xff]
        %v296 = vld [vmem:[%s3 + $0x10] sm:$0xff]
        %v297 = vld [vmem:[%s3 + $0x18] sm:$0xff]
        %v298 = vld [vmem:[%s245] sm:$0xff]
        %v299 = vld [vmem:[%s245 + $0x10] sm:$0xff]
        %v300 = vld [vmem:[%s245 + $0x20] sm:$0xff]
        %v301 = vld [vmem:[%s245 + $0x30] sm:$0xff]
        %v302 = vld [vmem:[%s2] sm:$0xff]
        %v303 = vld [vmem:[%s2 + $0x8] sm:$0xff]
        %v304 = vld [vmem:[%s2 + $0x10] sm:$0xff]
        %v305 = vld [vmem:[%s2 + $0x18] sm:$0xff]
        %v306 = vld [vmem:[%s2 + $0x20] sm:$0xff]
        %v307 = vld [vmem:[%s2 + $0x28] sm:$0xff]
        %v308 = vld [vmem:[%s2 + $0x30] sm:$0xff]
        %v309 = vld [vmem:[%s2 + $0x38] sm:$0xff]
        %v310 = vld [vmem:[%s2 + $0x40] sm:$0xff]
        %v311 = vld [vmem:[%s2 + $0x48] sm:$0xff]
        %v312 = vld [vmem:[%s2 + $0x50] sm:$0xff]
        %v313 = vld [vmem:[%s2 + $0x58] sm:$0xff]
        %v314 = vld [vmem:[%s2 + $0x60] sm:$0xff]
        %v315 = vld [vmem:[%s2 + $0x68] sm:$0xff]
        %v316 = vld [vmem:[%s2 + $0x70] sm:$0xff]
        %v317 = vld [vmem:[%s2 + $0x78] sm:$0xff]
        %vm318 = vcmask 261120
        %v320 = vsel %vm318, %v278, 0
        %v323 = vsel %vm318, %v279, 0
        %v326 = vsel %vm318, %v280, 0
        %v329 = vsel %vm318, %v281, 0
        %v332 = vsel %vm318, %v282, 0
        %v335 = vsel %vm318, %v283, 0
        %v338 = vsel %vm318, %v284, 0
        %v341 = vsel %vm318, %v285, 0
        %v344 = vsel %vm318, %v286, 0
        %v347 = vsel %vm318, %v287, 0
        %v350 = vsel %vm318, %v288, 0
        %v353 = vsel %vm318, %v289, 0
        %v356 = vsel %vm318, %v290, 0
        %v359 = vsel %vm318, %v291, 0
        %v362 = vsel %vm318, %v292, 0
        %v365 = vsel %vm318, %v293, 0
        %367 = vmatprep.subr.mxu0 0.0
        %368 = vmatpush1.msra.mxu0 %v298
        %369 = vmatprep.subr.mxu0 0.0
        %370 = vmatpush1.msra.mxu0 %v299
        %371 = vmatprep.subr.mxu0 0.0
        %372 = vmatpush1.msra.mxu0 %v300
        %373 = vmatprep.subr.mxu0 0.0
        %374 = vmatpush1.msra.mxu0 %v301
        %375 = vmatprep.subr.mxu0 0.0
        %376 = vmatpush1.msra.mxu0 0.0
        %377 = vmatprep.subr.mxu0 0.0
        %378 = vmatpush1.msra.mxu0 0.0
        %379 = vmatprep.subr.mxu0 0.0
        %380 = vmatpush1.msra.mxu0 0.0
        %381 = vmatprep.subr.mxu0 0.0
        %382 = vmatpush1.msra.mxu0 0.0
        %383 = vmatprep.subr.mxu0 0.0
        %384 = vmatpush1.msra.mxu0 0.0
        %385 = vmatprep.subr.mxu0 0.0
        %386 = vmatpush1.msra.mxu0 0.0
        %387 = vmatprep.subr.mxu0 0.0
        %388 = vmatpush1.msra.mxu0 0.0
        %389 = vmatprep.subr.mxu0 0.0
        %390 = vmatpush1.msra.mxu0 0.0
        %391 = vmatprep.subr.mxu0 0.0
        %392 = vmatpush1.msra.mxu0 0.0
        %393 = vmatprep.subr.mxu0 0.0
        %394 = vmatpush1.msra.mxu0 0.0
        %395 = vmatprep.subr.mxu0 0.0
        %396 = vmatpush1.msra.mxu0 0.0
        %397 = vmatprep.subr.mxu0 0.0
        %398 = vmatpush1.msra.mxu0 0.0
        %399 = vmatprep.subr.mxu0 0.0
        %400 = vmatpush1.msra.mxu0 0.0
        %401 = vmatprep.subr.mxu0 0.0
        %402 = vmatpush1.msra.mxu0 0.0
        %403 = vmatprep.subr.mxu0 0.0
        %404 = vmatpush1.msra.mxu0 0.0
        %405 = vmatprep.subr.mxu0 0.0
        %406 = vmatpush1.msra.mxu0 0.0
        %407 = vmatprep.subr.mxu0 0.0
        %408 = vmatpush1.msra.mxu0 0.0
        %409 = vmatprep.subr.mxu0 0.0
        %410 = vmatpush1.msra.mxu0 0.0
        %411 = vmatprep.subr.mxu0 0.0
        %412 = vmatpush1.msra.mxu0 0.0
        %413 = vmatprep.subr.mxu0 0.0
        %414 = vmatpush1.msra.mxu0 0.0
        %415 = vmatprep.subr.mxu0 0.0
        %416 = vmatpush1.msra.mxu0 0.0
        %417 = vmatprep.subr.mxu0 0.0
        %418 = vmatpush1.msra.mxu0 0.0
        %419 = vmatprep.subr.mxu0 0.0
        %420 = vmatpush1.msra.mxu0 0.0
        %421 = vmatprep.subr.mxu0 0.0
        %422 = vmatpush1.msra.mxu0 0.0
        %423 = vmatprep.subr.mxu0 0.0
        %424 = vmatpush1.msra.mxu0 0.0
        %425 = vmatprep.subr.mxu0 0.0
        %426 = vmatpush1.msra.mxu0 0.0
        %427 = vmatprep.subr.mxu0 0.0
        %428 = vmatpush1.msra.mxu0 0.0
        %429 = vmatprep.subr.mxu0 0.0
        %430 = vmatpush1.msra.mxu0 0.0
        %431 = vmatprep.mubr.f32.mxu0 0.0
        %432 = vmatmul.mubr.f32.gmra.mrb[0].mxu0 %v320
        %v433 = vpop.f32.mrb[0].mxu0
        %v434 = vadd.f32 %v302, %v433
        %v435 = vpop.f32.mrb[0].mxu0
        %436 = vmatprep.mubr.f32.mxu0 0.0
        %437 = vmatmul.mubr.f32.gmra.mrb[0].mxu0 %v323
        %v438 = vpop.f32.mrb[0].mxu0
        %v439 = vadd.f32 %v303, %v438
        %v440 = vpop.f32.mrb[0].mxu0
        %441 = vmatprep.mubr.f32.mxu0 0.0
        %442 = vmatmul.mubr.f32.gmra.mrb[0].mxu0 %v326
        %v443 = vpop.f32.mrb[0].mxu0
        %v444 = vadd.f32 %v304, %v443
        %v445 = vpop.f32.mrb[0].mxu0
        %446 = vmatprep.mubr.f32.mxu0 0.0
        %447 = vmatmul.mubr.f32.gmra.mrb[0].mxu0 %v329
        %v448 = vpop.f32.mrb[0].mxu0
        %v449 = vadd.f32 %v305, %v448
        %v450 = vpop.f32.mrb[0].mxu0
        %451 = vmatprep.mubr.f32.mxu0 0.0
        %452 = vmatmul.mubr.f32.gmra.mrb[0].mxu0 %v332
        %v453 = vpop.f32.mrb[0].mxu0
        %v454 = vadd.f32 %v306, %v453
        %v455 = vpop.f32.mrb[0].mxu0
        %456 = vmatprep.mubr.f32.mxu0 0.0
        %457 = vmatmul.mubr.f32.gmra.mrb[0].mxu0 %v335
        %v458 = vpop.f32.mrb[0].mxu0
        %v459 = vadd.f32 %v307, %v458
        %v460 = vpop.f32.mrb[0].mxu0
        %461 = vmatprep.mubr.f32.mxu0 0.0
        %462 = vmatmul.mubr.f32.gmra.mrb[0].mxu0 %v338
        %v463 = vpop.f32.mrb[0].mxu0
        %v464 = vadd.f32 %v308, %v463
        %v465 = vpop.f32.mrb[0].mxu0
        %466 = vmatprep.mubr.f32.mxu0 0.0
        %467 = vmatmul.mubr.f32.gmra.mrb[0].mxu0 %v341
        %v468 = vpop.f32.mrb[0].mxu0
        %v469 = vadd.f32 %v309, %v468
        %v470 = vpop.f32.mrb[0].mxu0
        %471 = vmatprep.mubr.f32.mxu0 0.0
        %472 = vmatmul.mubr.f32.gmra.mrb[0].mxu0 %v344
        %v473 = vpop.f32.mrb[0].mxu0
        %v474 = vadd.f32 %v310, %v473
        %v475 = vpop.f32.mrb[0].mxu0
        %476 = vmatprep.mubr.f32.mxu0 0.0
        %477 = vmatmul.mubr.f32.gmra.mrb[0].mxu0 %v347
        %v478 = vpop.f32.mrb[0].mxu0
        %v479 = vadd.f32 %v311, %v478
        %v480 = vpop.f32.mrb[0].mxu0
        %481 = vmatprep.mubr.f32.mxu0 0.0
        %482 = vmatmul.mubr.f32.gmra.mrb[0].mxu0 %v350
        %v483 = vpop.f32.mrb[0].mxu0
        %v484 = vadd.f32 %v312, %v483
        %v485 = vpop.f32.mrb[0].mxu0
        %486 = vmatprep.mubr.f32.mxu0 0.0
        %487 = vmatmul.mubr.f32.gmra.mrb[0].mxu0 %v353
        %v488 = vpop.f32.mrb[0].mxu0
        %v489 = vadd.f32 %v313, %v488
        %v490 = vpop.f32.mrb[0].mxu0
        %491 = vmatprep.mubr.f32.mxu0 0.0
        %492 = vmatmul.mubr.f32.gmra.mrb[0].mxu0 %v356
        %v493 = vpop.f32.mrb[0].mxu0
        %v494 = vadd.f32 %v314, %v493
        %v495 = vpop.f32.mrb[0].mxu0
        %496 = vmatprep.mubr.f32.mxu0 0.0
        %497 = vmatmul.mubr.f32.gmra.mrb[0].mxu0 %v359
        %v498 = vpop.f32.mrb[0].mxu0
        %v499 = vadd.f32 %v315, %v498
        %v500 = vpop.f32.mrb[0].mxu0
        %501 = vmatprep.mubr.f32.mxu0 0.0
        %502 = vmatmul.mubr.f32.gmra.mrb[0].mxu0 %v362
        %v503 = vpop.f32.mrb[0].mxu0
        %v504 = vadd.f32 %v316, %v503
        %v505 = vpop.f32.mrb[0].mxu0
        %506 = vmatprep.mubr.f32.mxu0 0.0
        %507 = vmatmul.mubr.f32.gmra.mrb[0].mxu0 %v365
        %v508 = vpop.f32.mrb[0].mxu0
        %v509 = vadd.f32 %v317, %v508
        %v510 = vpop.f32.mrb[0].mxu0
        %511 = vdwg.mxu0
        %v512 = vxor.u32 %v434, 2147483648
        %v513 = vxor.u32 %v439, 2147483648
        %v514 = vxor.u32 %v444, 2147483648
        %v515 = vxor.u32 %v449, 2147483648
        %v516 = vxor.u32 %v454, 2147483648
        %v517 = vxor.u32 %v459, 2147483648
        %v518 = vxor.u32 %v464, 2147483648
        %v519 = vxor.u32 %v469, 2147483648
        %v520 = vxor.u32 %v474, 2147483648
        %v521 = vxor.u32 %v479, 2147483648
        %v522 = vxor.u32 %v484, 2147483648
        %v523 = vxor.u32 %v489, 2147483648
        %v524 = vxor.u32 %v494, 2147483648
        %v525 = vxor.u32 %v499, 2147483648
        %v526 = vxor.u32 %v504, 2147483648
        %v527 = vxor.u32 %v509, 2147483648
        %v528 = vmul.f32 %v512, 1.442695
        %v529 = vpow.pop %v528
        %v530 = vmul.f32 %v513, 1.442695
        %v531 = vpow.pop %v530
        %v532 = vmul.f32 %v514, 1.442695
        %v533 = vpow.pop %v532
        %v534 = vmul.f32 %v515, 1.442695
        %v535 = vpow.pop %v534
        %v536 = vmul.f32 %v516, 1.442695
        %v537 = vpow.pop %v536
        %v538 = vmul.f32 %v517, 1.442695
        %v539 = vpow.pop %v538
        %v540 = vmul.f32 %v518, 1.442695
        %v541 = vpow.pop %v540
        %v542 = vmul.f32 %v519, 1.442695
        %v543 = vpow.pop %v542
        %v544 = vmul.f32 %v520, 1.442695
        %v545 = vpow.pop %v544
        %v546 = vmul.f32 %v521, 1.442695
        %v547 = vpow.pop %v546
        %v548 = vmul.f32 %v522, 1.442695
        %v549 = vpow.pop %v548
        %v550 = vmul.f32 %v523, 1.442695
        %v551 = vpow.pop %v550
        %v552 = vmul.f32 %v524, 1.442695
        %v553 = vpow.pop %v552
        %v554 = vmul.f32 %v525, 1.442695
        %v555 = vpow.pop %v554
        %v556 = vmul.f32 %v526, 1.442695
        %v557 = vpow.pop %v556
        %v558 = vmul.f32 %v527, 1.442695
        %v559 = vpow.pop %v558
        %v560 = vadd.f32 %v529, 1.0
        %v561 = vadd.f32 %v531, 1.0
        %v562 = vadd.f32 %v533, 1.0
        %v563 = vadd.f32 %v535, 1.0
        %v564 = vadd.f32 %v537, 1.0
        %v565 = vadd.f32 %v539, 1.0
        %v566 = vadd.f32 %v541, 1.0
        %v567 = vadd.f32 %v543, 1.0
        %v568 = vadd.f32 %v545, 1.0
        %v569 = vadd.f32 %v547, 1.0
        %v570 = vadd.f32 %v549, 1.0
        %v571 = vadd.f32 %v551, 1.0
        %v572 = vadd.f32 %v553, 1.0
        %v573 = vadd.f32 %v555, 1.0
        %v574 = vadd.f32 %v557, 1.0
        %v575 = vadd.f32 %v559, 1.0
        %v576 = vrcp.pop %v560
        %v577 = vmul.f32 1.0, %v576
        %v578 = vrcp.pop %v561
        %v579 = vmul.f32 1.0, %v578
        %v580 = vrcp.pop %v562
        %v581 = vmul.f32 1.0, %v580
        %v582 = vrcp.pop %v563
        %v583 = vmul.f32 1.0, %v582
        %v584 = vrcp.pop %v564
        %v585 = vmul.f32 1.0, %v584
        %v586 = vrcp.pop %v565
        %v587 = vmul.f32 1.0, %v586
        %v588 = vrcp.pop %v566
        %v589 = vmul.f32 1.0, %v588
        %v590 = vrcp.pop %v567
        %v591 = vmul.f32 1.0, %v590
        %v592 = vrcp.pop %v568
        %v593 = vmul.f32 1.0, %v592
        %v594 = vrcp.pop %v569
        %v595 = vmul.f32 1.0, %v594
        %v596 = vrcp.pop %v570
        %v597 = vmul.f32 1.0, %v596
        %v598 = vrcp.pop %v571
        %v599 = vmul.f32 1.0, %v598
        %v600 = vrcp.pop %v572
        %v601 = vmul.f32 1.0, %v600
        %v602 = vrcp.pop %v573
        %v603 = vmul.f32 1.0, %v602
        %v604 = vrcp.pop %v574
        %v605 = vmul.f32 1.0, %v604
        %v606 = vrcp.pop %v575
        %v607 = vmul.f32 1.0, %v606
        %608 = vmatprep.subr.mxu0 0.0
        %609 = vmatpush1.msra.mxu0 %v577
        %610 = vmatprep.subr.mxu0 0.0
        %611 = vmatpush1.msra.mxu0 %v579
        %612 = vmatprep.subr.mxu0 0.0
        %613 = vmatpush1.msra.mxu0 %v581
        %614 = vmatprep.subr.mxu0 0.0
        %615 = vmatpush1.msra.mxu0 %v583
        %616 = vmatprep.subr.mxu0 0.0
        %617 = vmatpush1.msra.mxu0 %v585
        %618 = vmatprep.subr.mxu0 0.0
        %619 = vmatpush1.msra.mxu0 %v587
        %620 = vmatprep.subr.mxu0 0.0
        %621 = vmatpush1.msra.mxu0 %v589
        %622 = vmatprep.subr.mxu0 0.0
        %623 = vmatpush1.msra.mxu0 %v591
        %624 = vmatprep.subr.mxu0 0.0
        %625 = vmatpush1.msra.mxu0 %v593
        %626 = vmatprep.subr.mxu0 0.0
        %627 = vmatpush1.msra.mxu0 %v595
        %628 = vmatprep.subr.mxu0 0.0
        %629 = vmatpush1.msra.mxu0 %v597
        %630 = vmatprep.subr.mxu0 0.0
        %631 = vmatpush1.msra.mxu0 %v599
        %632 = vmatprep.subr.mxu0 0.0
        %633 = vmatpush1.msra.mxu0 %v601
        %634 = vmatprep.subr.mxu0 0.0
        %635 = vmatpush1.msra.mxu0 %v603
        %636 = vmatprep.subr.mxu0 0.0
        %637 = vmatpush1.msra.mxu0 %v605
        %638 = vmatprep.subr.mxu0 0.0
        %639 = vmatpush1.msra.mxu0 %v607
        %640 = vmatprep.subr.mxu0 0.0
        %641 = vmatpush1.msra.mxu0 0.0
        %642 = vmatprep.subr.mxu0 0.0
        %643 = vmatpush1.msra.mxu0 0.0
        %644 = vmatprep.subr.mxu0 0.0
        %645 = vmatpush1.msra.mxu0 0.0
        %646 = vmatprep.subr.mxu0 0.0
        %647 = vmatpush1.msra.mxu0 0.0
        %648 = vmatprep.subr.mxu0 0.0
        %649 = vmatpush1.msra.mxu0 0.0
        %650 = vmatprep.subr.mxu0 0.0
        %651 = vmatpush1.msra.mxu0 0.0
        %652 = vmatprep.subr.mxu0 0.0
        %653 = vmatpush1.msra.mxu0 0.0
        %654 = vmatprep.subr.mxu0 0.0
        %655 = vmatpush1.msra.mxu0 0.0
        %656 = vmatprep.subr.mxu0 0.0
        %657 = vmatpush1.msra.mxu0 0.0
        %658 = vmatprep.subr.mxu0 0.0
        %659 = vmatpush1.msra.mxu0 0.0
        %660 = vmatprep.subr.mxu0 0.0
        %661 = vmatpush1.msra.mxu0 0.0
        %662 = vmatprep.subr.mxu0 0.0
        %663 = vmatpush1.msra.mxu0 0.0
        %664 = vmatprep.subr.mxu0 0.0
        %665 = vmatpush1.msra.mxu0 0.0
        %666 = vmatprep.subr.mxu0 0.0
        %667 = vmatpush1.msra.mxu0 0.0
        %668 = vmatprep.subr.mxu0 0.0
        %669 = vmatpush1.msra.mxu0 0.0
        %670 = vmatprep.subr.mxu0 0.0
        %671 = vmatpush1.msra.mxu0 0.0
        %672 = vmatprep.mubr.f32.mxu0 0.0
        %673 = vmatmul.mubr.f32.gmra.mrb[0].mxu0 1.0
        %v674 = vpop.f32.mrb[0].mxu0
        %v675 = vadd.f32 0.0, %v674
        %v676 = vpop.f32.mrb[0].mxu0
        %677 = vdwg.mxu0
        %v678 = vadd.f32 %v675, 1e-09
        %v679 = vrcp.pop %v678
        %v680 = vlaneseq
        %v681 = vshrl.u32 %v680, 7
        %v682 = vsub.s32 0, %v681
        %v683 = vrot.slane %v679, %v682
        %v684 = vmul.f32 %v577, %v683
        %v685 = vmul.f32 %v579, %v683
        %v686 = vmul.f32 %v581, %v683
        %v687 = vmul.f32 %v583, %v683
        %v688 = vmul.f32 %v585, %v683
        %v689 = vmul.f32 %v587, %v683
        %v690 = vmul.f32 %v589, %v683
        %v691 = vmul.f32 %v591, %v683
        %v692 = vmul.f32 %v593, %v683
        %v693 = vmul.f32 %v595, %v683
        %v694 = vmul.f32 %v597, %v683
        %v695 = vmul.f32 %v599, %v683
        %v696 = vmul.f32 %v601, %v683
        %v697 = vmul.f32 %v603, %v683
        %v698 = vmul.f32 %v605, %v683
        %v699 = vmul.f32 %v607, %v683
        %v700 = vld [vmem:[#allocation5] sm:$0xff]
        %v701 = vld [vmem:[#allocation5 + $0x8] sm:$0xff]
        %v702 = vld [vmem:[#allocation5 + $0x10] sm:$0xff]
        %v703 = vld [vmem:[#allocation5 + $0x18] sm:$0xff]
        %704 = vmatprep.subr.mxu0 0.0
        %705 = vmatpush1.msra.mxu0 %v684
        %706 = vmatprep.subr.mxu0 0.0
        %707 = vmatpush1.msra.mxu0 %v685
        %708 = vmatprep.subr.mxu0 0.0
        %709 = vmatpush1.msra.mxu0 %v686
        %710 = vmatprep.subr.mxu0 0.0
        %711 = vmatpush1.msra.mxu0 %v687
        %712 = vmatprep.subr.mxu0 0.0
        %713 = vmatpush1.msra.mxu0 %v688
        %714 = vmatprep.subr.mxu0 0.0
        %715 = vmatpush1.msra.mxu0 %v689
        %716 = vmatprep.subr.mxu0 0.0
        %717 = vmatpush1.msra.mxu0 %v690
        %718 = vmatprep.subr.mxu0 0.0
        %719 = vmatpush1.msra.mxu0 %v691
        %720 = vmatprep.subr.mxu0 0.0
        %721 = vmatpush1.msra.mxu0 %v692
        %722 = vmatprep.subr.mxu0 0.0
        %723 = vmatpush1.msra.mxu0 %v693
        %724 = vmatprep.subr.mxu0 0.0
        %725 = vmatpush1.msra.mxu0 %v694
        %726 = vmatprep.subr.mxu0 0.0
        %727 = vmatpush1.msra.mxu0 %v695
        %728 = vmatprep.subr.mxu0 0.0
        %729 = vmatpush1.msra.mxu0 %v696
        %730 = vmatprep.subr.mxu0 0.0
        %731 = vmatpush1.msra.mxu0 %v697
        %732 = vmatprep.subr.mxu0 0.0
        %733 = vmatpush1.msra.mxu0 %v698
        %734 = vmatprep.subr.mxu0 0.0
        %735 = vmatpush1.msra.mxu0 %v699
        %736 = vmatprep.subr.mxu0 0.0
        %737 = vmatpush1.msra.mxu0 0.0
        %738 = vmatprep.subr.mxu0 0.0
        %739 = vmatpush1.msra.mxu0 0.0
        %740 = vmatprep.subr.mxu0 0.0
        %741 = vmatpush1.msra.mxu0 0.0
        %742 = vmatprep.subr.mxu0 0.0
        %743 = vmatpush1.msra.mxu0 0.0
        %744 = vmatprep.subr.mxu0 0.0
        %745 = vmatpush1.msra.mxu0 0.0
        %746 = vmatprep.subr.mxu0 0.0
        %747 = vmatpush1.msra.mxu0 0.0
        %748 = vmatprep.subr.mxu0 0.0
        %749 = vmatpush1.msra.mxu0 0.0
        %750 = vmatprep.subr.mxu0 0.0
        %751 = vmatpush1.msra.mxu0 0.0
        %752 = vmatprep.subr.mxu0 0.0
        %753 = vmatpush1.msra.mxu0 0.0
        %754 = vmatprep.subr.mxu0 0.0
        %755 = vmatpush1.msra.mxu0 0.0
        %756 = vmatprep.subr.mxu0 0.0
        %757 = vmatpush1.msra.mxu0 0.0
        %758 = vmatprep.subr.mxu0 0.0
        %759 = vmatpush1.msra.mxu0 0.0
        %760 = vmatprep.subr.mxu0 0.0
        %761 = vmatpush1.msra.mxu0 0.0
        %762 = vmatprep.subr.mxu0 0.0
        %763 = vmatpush1.msra.mxu0 0.0
        %764 = vmatprep.subr.mxu0 0.0
        %765 = vmatpush1.msra.mxu0 0.0
        %766 = vmatprep.subr.mxu0 0.0
        %767 = vmatpush1.msra.mxu0 0.0
        %768 = vmatprep.mubr.f32.mxu0 0.0
        %769 = vmatmul.mubr.f32.gmra.mrb[0].mxu0 %v294
        %v770 = vpop.f32.mrb[0].mxu0
        %v771 = vadd.f32 %v700, %v770
        %v772 = vpop.f32.mrb[0].mxu0
        %773 = vmatprep.mubr.f32.mxu0 0.0
        %774 = vmatmul.mubr.f32.gmra.mrb[0].mxu0 %v295
        %v775 = vpop.f32.mrb[0].mxu0
        %v776 = vadd.f32 %v701, %v775
        %v777 = vpop.f32.mrb[0].mxu0
        %778 = vmatprep.mubr.f32.mxu0 0.0
        %779 = vmatmul.mubr.f32.gmra.mrb[0].mxu0 %v296
        %v780 = vpop.f32.mrb[0].mxu0
        %v781 = vadd.f32 %v702, %v780
        %v782 = vpop.f32.mrb[0].mxu0
        %783 = vmatprep.mubr.f32.mxu0 0.0
        %784 = vmatmul.mubr.f32.gmra.mrb[0].mxu0 %v297
        %v785 = vpop.f32.mrb[0].mxu0
        %v786 = vadd.f32 %v703, %v785
        %v787 = vpop.f32.mrb[0].mxu0
        %788 = vdwg.mxu0
        %v789 = vadd.f32 %v771, %v298
        %v790 = vadd.f32 %v776, %v299
        %v791 = vadd.f32 %v781, %v300
        %v792 = vadd.f32 %v786, %v301
        %v793 = vmax.f32 %v789, 0.0
        %v794 = vmax.f32 %v790, 0.0
        %v795 = vmax.f32 %v791, 0.0
        %v796 = vmax.f32 %v792, 0.0
        %797 = vst [vmem:[%s275] sm:$0xff] %v793
        %798 = vst [vmem:[%s275 + $0x10] sm:$0xff] %v794
        %799 = vst [vmem:[%s275 + $0x20] sm:$0xff] %v795
        %800 = vst [vmem:[%s275 + $0x30] sm:$0xff] %v796
        %s801 = scalar_lea.vmem %s245, 8 [#allocation2]
        %v802 = vld [vmem:[%s801] sm:$0xff]
        %v803 = vld [vmem:[%s801 + $0x10] sm:$0xff]
        %v804 = vld [vmem:[%s801 + $0x20] sm:$0xff]
        %v805 = vld [vmem:[%s801 + $0x30] sm:$0xff]
        %v806 = vld [vmem:[%s2] sm:$0xff]
        %v807 = vld [vmem:[%s2 + $0x8] sm:$0xff]
        %v808 = vld [vmem:[%s2 + $0x10] sm:$0xff]
        %v809 = vld [vmem:[%s2 + $0x18] sm:$0xff]
        %v810 = vld [vmem:[%s2 + $0x20] sm:$0xff]
        %v811 = vld [vmem:[%s2 + $0x28] sm:$0xff]
        %v812 = vld [vmem:[%s2 + $0x30] sm:$0xff]
        %v813 = vld [vmem:[%s2 + $0x38] sm:$0xff]
        %v814 = vld [vmem:[%s2 + $0x40] sm:$0xff]
        %v815 = vld [vmem:[%s2 + $0x48] sm:$0xff]
        %v816 = vld [vmem:[%s2 + $0x50] sm:$0xff]
        %v817 = vld [vmem:[%s2 + $0x58] sm:$0xff]
        %v818 = vld [vmem:[%s2 + $0x60] sm:$0xff]
        %v819 = vld [vmem:[%s2 + $0x68] sm:$0xff]
        %v820 = vld [vmem:[%s2 + $0x70] sm:$0xff]
        %v821 = vld [vmem:[%s2 + $0x78] sm:$0xff]
        %822 = vmatprep.subr.mxu0 0.0
        %823 = vmatpush1.msra.mxu0 %v802
        %824 = vmatprep.subr.mxu0 0.0
        %825 = vmatpush1.msra.mxu0 %v803
        %826 = vmatprep.subr.mxu0 0.0
        %827 = vmatpush1.msra.mxu0 %v804
        %828 = vmatprep.subr.mxu0 0.0
        %829 = vmatpush1.msra.mxu0 %v805
        %830 = vmatprep.subr.mxu0 0.0
        %831 = vmatpush1.msra.mxu0 0.0
        %832 = vmatprep.subr.mxu0 0.0
        %833 = vmatpush1.msra.mxu0 0.0
        %834 = vmatprep.subr.mxu0 0.0
        %835 = vmatpush1.msra.mxu0 0.0
        %836 = vmatprep.subr.mxu0 0.0
        %837 = vmatpush1.msra.mxu0 0.0
        %838 = vmatprep.subr.mxu0 0.0
        %839 = vmatpush1.msra.mxu0 0.0
        %840 = vmatprep.subr.mxu0 0.0
        %841 = vmatpush1.msra.mxu0 0.0
        %842 = vmatprep.subr.mxu0 0.0
        %843 = vmatpush1.msra.mxu0 0.0
        %844 = vmatprep.subr.mxu0 0.0
        %845 = vmatpush1.msra.mxu0 0.0
        %846 = vmatprep.subr.mxu0 0.0
        %847 = vmatpush1.msra.mxu0 0.0
        %848 = vmatprep.subr.mxu0 0.0
        %849 = vmatpush1.msra.mxu0 0.0
        %850 = vmatprep.subr.mxu0 0.0
        %851 = vmatpush1.msra.mxu0 0.0
        %852 = vmatprep.subr.mxu0 0.0
        %853 = vmatpush1.msra.mxu0 0.0
        %854 = vmatprep.subr.mxu0 0.0
        %855 = vmatpush1.msra.mxu0 0.0
        %856 = vmatprep.subr.mxu0 0.0
        %857 = vmatpush1.msra.mxu0 0.0
        %858 = vmatprep.subr.mxu0 0.0
        %859 = vmatpush1.msra.mxu0 0.0
        %860 = vmatprep.subr.mxu0 0.0
        %861 = vmatpush1.msra.mxu0 0.0
        %862 = vmatprep.subr.mxu0 0.0
        %863 = vmatpush1.msra.mxu0 0.0
        %864 = vmatprep.subr.mxu0 0.0
        %865 = vmatpush1.msra.mxu0 0.0
        %866 = vmatprep.subr.mxu0 0.0
        %867 = vmatpush1.msra.mxu0 0.0
        %868 = vmatprep.subr.mxu0 0.0
        %869 = vmatpush1.msra.mxu0 0.0
        %870 = vmatprep.subr.mxu0 0.0
        %871 = vmatpush1.msra.mxu0 0.0
        %872 = vmatprep.subr.mxu0 0.0
        %873 = vmatpush1.msra.mxu0 0.0
        %874 = vmatprep.subr.mxu0 0.0
        %875 = vmatpush1.msra.mxu0 0.0
        %876 = vmatprep.subr.mxu0 0.0
        %877 = vmatpush1.msra.mxu0 0.0
        %878 = vmatprep.subr.mxu0 0.0
        %879 = vmatpush1.msra.mxu0 0.0
        %880 = vmatprep.subr.mxu0 0.0
        %881 = vmatpush1.msra.mxu0 0.0
        %882 = vmatprep.subr.mxu0 0.0
        %883 = vmatpush1.msra.mxu0 0.0
        %884 = vmatprep.subr.mxu0 0.0
        %885 = vmatpush1.msra.mxu0 0.0
        %886 = vmatprep.mubr.f32.mxu0 0.0
        %887 = vmatmul.mubr.f32.gmra.mrb[0].mxu0 %v320
        %v888 = vpop.f32.mrb[0].mxu0
        %v889 = vadd.f32 %v806, %v888
        %v890 = vpop.f32.mrb[0].mxu0
        %891 = vmatprep.mubr.f32.mxu0 0.0
        %892 = vmatmul.mubr.f32.gmra.mrb[0].mxu0 %v323
        %v893 = vpop.f32.mrb[0].mxu0
        %v894 = vadd.f32 %v807, %v893
        %v895 = vpop.f32.mrb[0].mxu0
        %896 = vmatprep.mubr.f32.mxu0 0.0
        %897 = vmatmul.mubr.f32.gmra.mrb[0].mxu0 %v326
        %v898 = vpop.f32.mrb[0].mxu0
        %v899 = vadd.f32 %v808, %v898
        %v900 = vpop.f32.mrb[0].mxu0
        %901 = vmatprep.mubr.f32.mxu0 0.0
        %902 = vmatmul.mubr.f32.gmra.mrb[0].mxu0 %v329
        %v903 = vpop.f32.mrb[0].mxu0
        %v904 = vadd.f32 %v809, %v903
        %v905 = vpop.f32.mrb[0].mxu0
        %906 = vmatprep.mubr.f32.mxu0 0.0
        %907 = vmatmul.mubr.f32.gmra.mrb[0].mxu0 %v332
        %v908 = vpop.f32.mrb[0].mxu0
        %v909 = vadd.f32 %v810, %v908
        %v910 = vpop.f32.mrb[0].mxu0
        %911 = vmatprep.mubr.f32.mxu0 0.0
        %912 = vmatmul.mubr.f32.gmra.mrb[0].mxu0 %v335
        %v913 = vpop.f32.mrb[0].mxu0
        %v914 = vadd.f32 %v811, %v913
        %v915 = vpop.f32.mrb[0].mxu0
        %916 = vmatprep.mubr.f32.mxu0 0.0
        %917 = vmatmul.mubr.f32.gmra.mrb[0].mxu0 %v338
        %v918 = vpop.f32.mrb[0].mxu0
        %v919 = vadd.f32 %v812, %v918
        %v920 = vpop.f32.mrb[0].mxu0
        %921 = vmatprep.mubr.f32.mxu0 0.0
        %922 = vmatmul.mubr.f32.gmra.mrb[0].mxu0 %v341
        %v923 = vpop.f32.mrb[0].mxu0
        %v924 = vadd.f32 %v813, %v923
        %v925 = vpop.f32.mrb[0].mxu0
        %926 = vmatprep.mubr.f32.mxu0 0.0
        %927 = vmatmul.mubr.f32.gmra.mrb[0].mxu0 %v344
        %v928 = vpop.f32.mrb[0].mxu0
        %v929 = vadd.f32 %v814, %v928
        %v930 = vpop.f32.mrb[0].mxu0
        %931 = vmatprep.mubr.f32.mxu0 0.0
        %932 = vmatmul.mubr.f32.gmra.mrb[0].mxu0 %v347
        %v933 = vpop.f32.mrb[0].mxu0
        %v934 = vadd.f32 %v815, %v933
        %v935 = vpop.f32.mrb[0].mxu0
        %936 = vmatprep.mubr.f32.mxu0 0.0
        %937 = vmatmul.mubr.f32.gmra.mrb[0].mxu0 %v350
        %v938 = vpop.f32.mrb[0].mxu0
        %v939 = vadd.f32 %v816, %v938
        %v940 = vpop.f32.mrb[0].mxu0
        %941 = vmatprep.mubr.f32.mxu0 0.0
        %942 = vmatmul.mubr.f32.gmra.mrb[0].mxu0 %v353
        %v943 = vpop.f32.mrb[0].mxu0
        %v944 = vadd.f32 %v817, %v943
        %v945 = vpop.f32.mrb[0].mxu0
        %946 = vmatprep.mubr.f32.mxu0 0.0
        %947 = vmatmul.mubr.f32.gmra.mrb[0].mxu0 %v356
        %v948 = vpop.f32.mrb[0].mxu0
        %v949 = vadd.f32 %v818, %v948
        %v950 = vpop.f32.mrb[0].mxu0
        %951 = vmatprep.mubr.f32.mxu0 0.0
        %952 = vmatmul.mubr.f32.gmra.mrb[0].mxu0 %v359
        %v953 = vpop.f32.mrb[0].mxu0
        %v954 = vadd.f32 %v819, %v953
        %v955 = vpop.f32.mrb[0].mxu0
        %956 = vmatprep.mubr.f32.mxu0 0.0
        %957 = vmatmul.mubr.f32.gmra.mrb[0].mxu0 %v362
        %v958 = vpop.f32.mrb[0].mxu0
        %v959 = vadd.f32 %v820, %v958
        %v960 = vpop.f32.mrb[0].mxu0
        %961 = vmatprep.mubr.f32.mxu0 0.0
        %962 = vmatmul.mubr.f32.gmra.mrb[0].mxu0 %v365
        %v963 = vpop.f32.mrb[0].mxu0
        %v964 = vadd.f32 %v821, %v963
        %v965 = vpop.f32.mrb[0].mxu0
        %966 = vdwg.mxu0
        %v967 = vxor.u32 %v889, 2147483648
        %v968 = vxor.u32 %v894, 2147483648
        %v969 = vxor.u32 %v899, 2147483648
        %v970 = vxor.u32 %v904, 2147483648
        %v971 = vxor.u32 %v909, 2147483648
        %v972 = vxor.u32 %v914, 2147483648
        %v973 = vxor.u32 %v919, 2147483648
        %v974 = vxor.u32 %v924, 2147483648
        %v975 = vxor.u32 %v929, 2147483648
        %v976 = vxor.u32 %v934, 2147483648
        %v977 = vxor.u32 %v939, 2147483648
        %v978 = vxor.u32 %v944, 2147483648
        %v979 = vxor.u32 %v949, 2147483648
        %v980 = vxor.u32 %v954, 2147483648
        %v981 = vxor.u32 %v959, 2147483648
        %v982 = vxor.u32 %v964, 2147483648
        %v983 = vmul.f32 %v967, 1.442695
        %v984 = vpow.pop %v983
        %v985 = vmul.f32 %v968, 1.442695
        %v986 = vpow.pop %v985
        %v987 = vmul.f32 %v969, 1.442695
        %v988 = vpow.pop %v987
        %v989 = vmul.f32 %v970, 1.442695
        %v990 = vpow.pop %v989
        %v991 = vmul.f32 %v971, 1.442695
        %v992 = vpow.pop %v991
        %v993 = vmul.f32 %v972, 1.442695
        %v994 = vpow.pop %v993
        %v995 = vmul.f32 %v973, 1.442695
        %v996 = vpow.pop %v995
        %v997 = vmul.f32 %v974, 1.442695
        %v998 = vpow.pop %v997
        %v999 = vmul.f32 %v975, 1.442695
        %v1000 = vpow.pop %v999
        %v1001 = vmul.f32 %v976, 1.442695
        %v1002 = vpow.pop %v1001
        %v1003 = vmul.f32 %v977, 1.442695
        %v1004 = vpow.pop %v1003
        %v1005 = vmul.f32 %v978, 1.442695
        %v1006 = vpow.pop %v1005
        %v1007 = vmul.f32 %v979, 1.442695
        %v1008 = vpow.pop %v1007
        %v1009 = vmul.f32 %v980, 1.442695
        %v1010 = vpow.pop %v1009
        %v1011 = vmul.f32 %v981, 1.442695
        %v1012 = vpow.pop %v1011
        %v1013 = vmul.f32 %v982, 1.442695
        %v1014 = vpow.pop %v1013
        %v1015 = vadd.f32 %v984, 1.0
        %v1016 = vadd.f32 %v986, 1.0
        %v1017 = vadd.f32 %v988, 1.0
        %v1018 = vadd.f32 %v990, 1.0
        %v1019 = vadd.f32 %v992, 1.0
        %v1020 = vadd.f32 %v994, 1.0
        %v1021 = vadd.f32 %v996, 1.0
        %v1022 = vadd.f32 %v998, 1.0
        %v1023 = vadd.f32 %v1000, 1.0
        %v1024 = vadd.f32 %v1002, 1.0
        %v1025 = vadd.f32 %v1004, 1.0
        %v1026 = vadd.f32 %v1006, 1.0
        %v1027 = vadd.f32 %v1008, 1.0
        %v1028 = vadd.f32 %v1010, 1.0
        %v1029 = vadd.f32 %v1012, 1.0
        %v1030 = vadd.f32 %v1014, 1.0
        %v1031 = vrcp.pop %v1015
        %v1032 = vmul.f32 1.0, %v1031
        %v1033 = vrcp.pop %v1016
        %v1034 = vmul.f32 1.0, %v1033
        %v1035 = vrcp.pop %v1017
        %v1036 = vmul.f32 1.0, %v1035
        %v1037 = vrcp.pop %v1018
        %v1038 = vmul.f32 1.0, %v1037
        %v1039 = vrcp.pop %v1019
        %v1040 = vmul.f32 1.0, %v1039
        %v1041 = vrcp.pop %v1020
        %v1042 = vmul.f32 1.0, %v1041
        %v1043 = vrcp.pop %v1021
        %v1044 = vmul.f32 1.0, %v1043
        %v1045 = vrcp.pop %v1022
        %v1046 = vmul.f32 1.0, %v1045
        %v1047 = vrcp.pop %v1023
        %v1048 = vmul.f32 1.0, %v1047
        %v1049 = vrcp.pop %v1024
        %v1050 = vmul.f32 1.0, %v1049
        %v1051 = vrcp.pop %v1025
        %v1052 = vmul.f32 1.0, %v1051
        %v1053 = vrcp.pop %v1026
        %v1054 = vmul.f32 1.0, %v1053
        %v1055 = vrcp.pop %v1027
        %v1056 = vmul.f32 1.0, %v1055
        %v1057 = vrcp.pop %v1028
        %v1058 = vmul.f32 1.0, %v1057
        %v1059 = vrcp.pop %v1029
        %v1060 = vmul.f32 1.0, %v1059
        %v1061 = vrcp.pop %v1030
        %v1062 = vmul.f32 1.0, %v1061
        %1063 = vmatprep.subr.mxu0 0.0
        %1064 = vmatpush1.msra.mxu0 %v1032
        %1065 = vmatprep.subr.mxu0 0.0
        %1066 = vmatpush1.msra.mxu0 %v1034
        %1067 = vmatprep.subr.mxu0 0.0
        %1068 = vmatpush1.msra.mxu0 %v1036
        %1069 = vmatprep.subr.mxu0 0.0
        %1070 = vmatpush1.msra.mxu0 %v1038
        %1071 = vmatprep.subr.mxu0 0.0
        %1072 = vmatpush1.msra.mxu0 %v1040
        %1073 = vmatprep.subr.mxu0 0.0
        %1074 = vmatpush1.msra.mxu0 %v1042
        %1075 = vmatprep.subr.mxu0 0.0
        %1076 = vmatpush1.msra.mxu0 %v1044
        %1077 = vmatprep.subr.mxu0 0.0
        %1078 = vmatpush1.msra.mxu0 %v1046
        %1079 = vmatprep.subr.mxu0 0.0
        %1080 = vmatpush1.msra.mxu0 %v1048
        %1081 = vmatprep.subr.mxu0 0.0
        %1082 = vmatpush1.msra.mxu0 %v1050
        %1083 = vmatprep.subr.mxu0 0.0
        %1084 = vmatpush1.msra.mxu0 %v1052
        %1085 = vmatprep.subr.mxu0 0.0
        %1086 = vmatpush1.msra.mxu0 %v1054
        %1087 = vmatprep.subr.mxu0 0.0
        %1088 = vmatpush1.msra.mxu0 %v1056
        %1089 = vmatprep.subr.mxu0 0.0
        %1090 = vmatpush1.msra.mxu0 %v1058
        %1091 = vmatprep.subr.mxu0 0.0
        %1092 = vmatpush1.msra.mxu0 %v1060
        %1093 = vmatprep.subr.mxu0 0.0
        %1094 = vmatpush1.msra.mxu0 %v1062
        %1095 = vmatprep.subr.mxu0 0.0
        %1096 = vmatpush1.msra.mxu0 0.0
        %1097 = vmatprep.subr.mxu0 0.0
        %1098 = vmatpush1.msra.mxu0 0.0
        %1099 = vmatprep.subr.mxu0 0.0
        %1100 = vmatpush1.msra.mxu0 0.0
        %1101 = vmatprep.subr.mxu0 0.0
        %1102 = vmatpush1.msra.mxu0 0.0
        %1103 = vmatprep.subr.mxu0 0.0
        %1104 = vmatpush1.msra.mxu0 0.0
        %1105 = vmatprep.subr.mxu0 0.0
        %1106 = vmatpush1.msra.mxu0 0.0
        %1107 = vmatprep.subr.mxu0 0.0
        %1108 = vmatpush1.msra.mxu0 0.0
        %1109 = vmatprep.subr.mxu0 0.0
        %1110 = vmatpush1.msra.mxu0 0.0
        %1111 = vmatprep.subr.mxu0 0.0
        %1112 = vmatpush1.msra.mxu0 0.0
        %1113 = vmatprep.subr.mxu0 0.0
        %1114 = vmatpush1.msra.mxu0 0.0
        %1115 = vmatprep.subr.mxu0 0.0
        %1116 = vmatpush1.msra.mxu0 0.0
        %1117 = vmatprep.subr.mxu0 0.0
        %1118 = vmatpush1.msra.mxu0 0.0
        %1119 = vmatprep.subr.mxu0 0.0
        %1120 = vmatpush1.msra.mxu0 0.0
        %1121 = vmatprep.subr.mxu0 0.0
        %1122 = vmatpush1.msra.mxu0 0.0
        %1123 = vmatprep.subr.mxu0 0.0
        %1124 = vmatpush1.msra.mxu0 0.0
        %1125 = vmatprep.subr.mxu0 0.0
        %1126 = vmatpush1.msra.mxu0 0.0
        %1127 = vmatprep.mubr.f32.mxu0 0.0
        %1128 = vmatmul.mubr.f32.gmra.mrb[0].mxu0 1.0
        %v1129 = vpop.f32.mrb[0].mxu0
        %v1130 = vadd.f32 0.0, %v1129
        %v1131 = vpop.f32.mrb[0].mxu0
        %1132 = vdwg.mxu0
        %v1133 = vadd.f32 %v1130, 1e-09
        %v1134 = vrcp.pop %v1133
        %v1135 = vlaneseq
        %v1136 = vshrl.u32 %v1135, 7
        %v1137 = vsub.s32 0, %v1136
        %v1138 = vrot.slane %v1134, %v1137
        %v1139 = vmul.f32 %v1032, %v1138
        %v1140 = vmul.f32 %v1034, %v1138
        %v1141 = vmul.f32 %v1036, %v1138
        %v1142 = vmul.f32 %v1038, %v1138
        %v1143 = vmul.f32 %v1040, %v1138
        %v1144 = vmul.f32 %v1042, %v1138
        %v1145 = vmul.f32 %v1044, %v1138
        %v1146 = vmul.f32 %v1046, %v1138
        %v1147 = vmul.f32 %v1048, %v1138
        %v1148 = vmul.f32 %v1050, %v1138
        %v1149 = vmul.f32 %v1052, %v1138
        %v1150 = vmul.f32 %v1054, %v1138
        %v1151 = vmul.f32 %v1056, %v1138
        %v1152 = vmul.f32 %v1058, %v1138
        %v1153 = vmul.f32 %v1060, %v1138
        %v1154 = vmul.f32 %v1062, %v1138
        %v1155 = vld [vmem:[#allocation5] sm:$0xff]
        %v1156 = vld [vmem:[#allocation5 + $0x8] sm:$0xff]
        %v1157 = vld [vmem:[#allocation5 + $0x10] sm:$0xff]
        %v1158 = vld [vmem:[#allocation5 + $0x18] sm:$0xff]
        %1159 = vmatprep.subr.mxu0 0.0
        %1160 = vmatpush1.msra.mxu0 %v1139
        %1161 = vmatprep.subr.mxu0 0.0
        %1162 = vmatpush1.msra.mxu0 %v1140
        %1163 = vmatprep.subr.mxu0 0.0
        %1164 = vmatpush1.msra.mxu0 %v1141
        %1165 = vmatprep.subr.mxu0 0.0
        %1166 = vmatpush1.msra.mxu0 %v1142
        %1167 = vmatprep.subr.mxu0 0.0
        %1168 = vmatpush1.msra.mxu0 %v1143
        %1169 = vmatprep.subr.mxu0 0.0
        %1170 = vmatpush1.msra.mxu0 %v1144
        %1171 = vmatprep.subr.mxu0 0.0
        %1172 = vmatpush1.msra.mxu0 %v1145
        %1173 = vmatprep.subr.mxu0 0.0
        %1174 = vmatpush1.msra.mxu0 %v1146
        %1175 = vmatprep.subr.mxu0 0.0
        %1176 = vmatpush1.msra.mxu0 %v1147
        %1177 = vmatprep.subr.mxu0 0.0
        %1178 = vmatpush1.msra.mxu0 %v1148
        %1179 = vmatprep.subr.mxu0 0.0
        %1180 = vmatpush1.msra.mxu0 %v1149
        %1181 = vmatprep.subr.mxu0 0.0
        %1182 = vmatpush1.msra.mxu0 %v1150
        %1183 = vmatprep.subr.mxu0 0.0
        %1184 = vmatpush1.msra.mxu0 %v1151
        %1185 = vmatprep.subr.mxu0 0.0
        %1186 = vmatpush1.msra.mxu0 %v1152
        %1187 = vmatprep.subr.mxu0 0.0
        %1188 = vmatpush1.msra.mxu0 %v1153
        %1189 = vmatprep.subr.mxu0 0.0
        %1190 = vmatpush1.msra.mxu0 %v1154
        %1191 = vmatprep.subr.mxu0 0.0
        %1192 = vmatpush1.msra.mxu0 0.0
        %1193 = vmatprep.subr.mxu0 0.0
        %1194 = vmatpush1.msra.mxu0 0.0
        %1195 = vmatprep.subr.mxu0 0.0
        %1196 = vmatpush1.msra.mxu0 0.0
        %1197 = vmatprep.subr.mxu0 0.0
        %1198 = vmatpush1.msra.mxu0 0.0
        %1199 = vmatprep.subr.mxu0 0.0
        %1200 = vmatpush1.msra.mxu0 0.0
        %1201 = vmatprep.subr.mxu0 0.0
        %1202 = vmatpush1.msra.mxu0 0.0
        %1203 = vmatprep.subr.mxu0 0.0
        %1204 = vmatpush1.msra.mxu0 0.0
        %1205 = vmatprep.subr.mxu0 0.0
        %1206 = vmatpush1.msra.mxu0 0.0
        %1207 = vmatprep.subr.mxu0 0.0
        %1208 = vmatpush1.msra.mxu0 0.0
        %1209 = vmatprep.subr.mxu0 0.0
        %1210 = vmatpush1.msra.mxu0 0.0
        %1211 = vmatprep.subr.mxu0 0.0
        %1212 = vmatpush1.msra.mxu0 0.0
        %1213 = vmatprep.subr.mxu0 0.0
        %1214 = vmatpush1.msra.mxu0 0.0
        %1215 = vmatprep.subr.mxu0 0.0
        %1216 = vmatpush1.msra.mxu0 0.0
        %1217 = vmatprep.subr.mxu0 0.0
        %1218 = vmatpush1.msra.mxu0 0.0
        %1219 = vmatprep.subr.mxu0 0.0
        %1220 = vmatpush1.msra.mxu0 0.0
        %1221 = vmatprep.subr.mxu0 0.0
        %1222 = vmatpush1.msra.mxu0 0.0
        %1223 = vmatprep.mubr.f32.mxu0 0.0
        %1224 = vmatmul.mubr.f32.gmra.mrb[0].mxu0 %v294
        %v1225 = vpop.f32.mrb[0].mxu0
        %v1226 = vadd.f32 %v1155, %v1225
        %v1227 = vpop.f32.mrb[0].mxu0
        %1228 = vmatprep.mubr.f32.mxu0 0.0
        %1229 = vmatmul.mubr.f32.gmra.mrb[0].mxu0 %v295
        %v1230 = vpop.f32.mrb[0].mxu0
        %v1231 = vadd.f32 %v1156, %v1230
        %v1232 = vpop.f32.mrb[0].mxu0
        %1233 = vmatprep.mubr.f32.mxu0 0.0
        %1234 = vmatmul.mubr.f32.gmra.mrb[0].mxu0 %v296
        %v1235 = vpop.f32.mrb[0].mxu0
        %v1236 = vadd.f32 %v1157, %v1235
        %v1237 = vpop.f32.mrb[0].mxu0
        %1238 = vmatprep.mubr.f32.mxu0 0.0
        %1239 = vmatmul.mubr.f32.gmra.mrb[0].mxu0 %v297
        %v1240 = vpop.f32.mrb[0].mxu0
        %v1241 = vadd.f32 %v1158, %v1240
        %v1242 = vpop.f32.mrb[0].mxu0
        %1243 = vdwg.mxu0
        %v1244 = vadd.f32 %v1226, %v802
        %v1245 = vadd.f32 %v1231, %v803
        %v1246 = vadd.f32 %v1236, %v804
        %v1247 = vadd.f32 %v1241, %v805
        %v1248 = vmax.f32 %v1244, 0.0
        %v1249 = vmax.f32 %v1245, 0.0
        %v1250 = vmax.f32 %v1246, 0.0
        %v1251 = vmax.f32 %v1247, 0.0
        %s1252 = scalar_lea.vmem %s275, 8 [#allocation7]
        %1253 = vst [vmem:[%s1252] sm:$0xff] %v1248
        %1254 = vst [vmem:[%s1252 + $0x10] sm:$0xff] %v1249
        %1255 = vst [vmem:[%s1252 + $0x20] sm:$0xff] %v1250
        %1256 = vst [vmem:[%s1252 + $0x30] sm:$0xff] %v1251
        %s1257 = sand.u32 %s157, 1
        %s1258 = scalar_lea.sflag [#allocation4], %s1257
        %s1259 = sand.u32 %s157, 1
        %s1260 = smul.addr %s1259, 64
        %s1261 = scalar_lea.vmem [#allocation7], %s1260
        // Predicated region
        $region49: #{tpu_custom_call.1} parent=39 // pred_check
          %p1262 = pneg %p167
        $region50: #{tpu_custom_call.1} parent=39 // pred_check_branch
          %1264 = sbr.rel (%p1262) target = $region52
        $region51: #{tpu_custom_call.1} parent=39 // pred_region
          %s1265 = smul.u32 2, %s28
          %s1267 = ssub.s32 1024, 1024
          %1268 = vsyncadd %s1258, %s1267
          %s1269 = smul.addr %s27, 16
          %s1270 = sadd.s32 %s1265, %s1269
          %s1271 = smul.addr %s1270, 128
          %s1272 = scalar_lea.hbm %s5, %s1271
          %s1273 = sshll.u32 %s1261, 4
          %s1274 = int_to_ptr.vmem [resolvable:$true] %s1273
          %1279 = dma.vmem_to_hbm [thread:$0]  %s1274, 1024, %s1272, %s1258, 256, 512, 16
        $region52: #{tpu_custom_call.1} parent=39 // pred_fallthru
          _
      $region40: #{tpu_custom_call.1} parent=5 // pred_fallthru
        _
      %p1280 = scmp.le.s32.totalorder 2, %s18
      // Predicated region
      $region53: #{tpu_custom_call.1} parent=5 // pred_check
        %p1281 = pneg %p1280
      $region54: #{tpu_custom_call.1} parent=5 // pred_check_branch
        %1283 = sbr.rel (%p1281) target = $region56
      $region55: #{tpu_custom_call.1} parent=5 // pred_region
        %s1284 = ssub.s32 %s18, 2
        // Predicated region
        $region57: #{tpu_custom_call.1} parent=55 // pred_check
          %p1285 = pneg %p173
        $region58: #{tpu_custom_call.1} parent=55 // pred_check_branch
          %1287 = sbr.rel (%p1285) target = $region60
        $region59: #{tpu_custom_call.1} parent=55 // pred_region
          %s1288 = sand.u32 %s158, 1
          %s1289 = scalar_lea.sflag [#allocation4], %s1288
          %s1290 = sand.u32 %s158, 1
          %s1291 = smul.addr %s1290, 64
          %s1292 = scalar_lea.vmem [#allocation7], %s1291
          %1293 = dma.done %s1289, 1024
        $region60: #{tpu_custom_call.1} parent=55 // pred_fallthru
          _
      $region56: #{tpu_custom_call.1} parent=5 // pred_fallthru
        _
    $region6: #{tpu_custom_call.1} parent=1 // loop_footer
      %s22 = sadd.s32 1, %s18
    $region7: #{tpu_custom_call.1} parent=1 // loop_footer_branch
      %17 = sbr.rel target = $region3
    $region8: #{tpu_custom_call.1} parent=1 // loop_exit
      _
    %1294 = vsyncpa [#allocation3], 1
    %s1295 = scalar_lea.sflag [#allocation3], 1
    %1296 = vsyncpa %s1295, 1
    %1297 = vsyncpa [#allocation6], 1
    %1298 = vsyncpa [#allocation4], 1
    %s1299 = scalar_lea.sflag [#allocation4], 1
    %1300 = vsyncpa %s1299, 1

</llo_original>
